<compile_context>
chip_gen: v6e
topology: v6e:2x2x1
jax: 0.10.0
libtpu: 0.0.40
codegen_flags: <defaults>
</compile_context>

<pallas_src>
import functools

import jax
import jax.numpy as jnp
from jax.experimental import pallas as pl
from jax.experimental.pallas import tpu as pltpu

IN_DIM = 16
HID_DIM = 4
LAT_DIM = 1


def autoencoder_kernel(x_ref, w1_ref, b1_ref, w2_ref, b2_ref,
                       w3_ref, b3_ref, w4_ref, b4_ref,
                       enc_ref, dec_ref):
    # x_ref: (TB, 16) natural batch-major block (f32 or bf16; compute in f32).
    x = x_ref[...].astype(jnp.float32)                            # (TB, 16)

    # ---- encoder (lane-dense: batch on the 128-wide lane axis) ----
    # Linear(16 -> 4) + Tanh.  The x.T relayout is fused into the MXU matmul
    # (same pattern as q @ k.T); result h is feature-major (4, TB).
    h = jnp.dot(w1_ref[...], x.T,
                preferred_element_type=jnp.float32) + b1_ref[...]
    h = jnp.tanh(h)                                               # (4, TB)

    # Linear(4 -> 1): VPU multiply + small XLU sublane reduce (keep off MXU).
    enc = jnp.sum(h * w2_ref[...], axis=0, keepdims=True) + b2_ref[0]  # (1, TB)
    enc_ref[...] = enc                                            # feature-major

    # ---- decoder (still lane-dense) ----
    # Linear(1 -> 4) + Tanh: broadcast the latent row across 4 sublanes.
    d = jnp.tanh(enc * w3_ref[...] + b3_ref[...])                 # (4, TB)

    # Linear(4 -> 16) + Sigmoid, then one XLU transpose back to the caller's
    # batch-major layout; cast to the output dtype only at the store.
    # Kept as a single fused chain so the (16, TB) intermediate makes exactly
    # one pass (v5e store-slot note from the review).
    dec = jax.nn.sigmoid(
        jnp.dot(w4_ref[...], d, preferred_element_type=jnp.float32)
        + b4_ref[...])                                            # (16, TB)
    dec_ref[...] = dec.T.astype(dec_ref.dtype)                    # (TB, 16)


def _cdiv(a, b):
    return (a + b - 1) // b


@functools.partial(jax.jit, static_argnames=("tile_b", "dec_dtype"))
def autoencoder_forward(x, params, tile_b=4096, dec_dtype=jnp.bfloat16):
    """x: (B, 16) float.  Returns (enc (B,1) f32, dec (B,16) dec_dtype).

    Matches the PyTorch module's forward; dec_dtype=jnp.float32 reproduces it
    exactly, the default bfloat16 halves the dominant HBM output stream.
    """
    B = x.shape[0]

    # --- grid / tile policy ---------------------------------------------
    # Pad the batch only to a multiple of 128 lanes-worth of rows; pick the
    # number of grid steps for pipelining + v7x megacore (>=8 when possible)
    # and cap the per-step tile (tile_b rows) for VMEM safety on all gens.
    nblk = _cdiv(B, 128)                       # 128-row blocks
    max_blk_per_step = max(tile_b // 128, 1)
    steps = max(_cdiv(nblk, max_blk_per_step), min(8, nblk))
    blk_per_step = _cdiv(nblk, steps)
    steps = _cdiv(nblk, blk_per_step)          # drop empty trailing steps
    TB = blk_per_step * 128
    B_pad = steps * TB                         # padding < TB rows

    if B_pad != B:
        x = jnp.pad(x, ((0, B_pad - B), (0, 0)))   # only for ragged batches

    const = lambda i: (0, 0)
    itemsize_out = jnp.dtype(dec_dtype).itemsize
    cost = pl.CostEstimate(
        flops=272 * B_pad,                     # 2*(4*16 + 4 + 4 + 4*16) per row
        transcendentals=24 * B_pad,            # 4 tanh + 4 tanh + 16 sigmoid
        bytes_accessed=B_pad * (x.dtype.itemsize * IN_DIM
                                + 4 * LAT_DIM
                                + itemsize_out * IN_DIM))

    enc_fm, dec_bm = pl.pallas_call(
        autoencoder_kernel,
        grid=(steps,),
        in_specs=[
            pl.BlockSpec((TB, IN_DIM), lambda i: (i, 0)),          # x tile
            pl.BlockSpec((HID_DIM, IN_DIM), const),                # w1 (4,16)
            pl.BlockSpec((HID_DIM, 1), const),                     # b1 (4,1)
            pl.BlockSpec((HID_DIM, 1), const),                     # w2 (4,1)
            pl.BlockSpec(memory_space=pltpu.SMEM),                 # b2 scalar
            pl.BlockSpec((HID_DIM, 1), const),                     # w3 (4,1)
            pl.BlockSpec((HID_DIM, 1), const),                     # b3 (4,1)
            pl.BlockSpec((IN_DIM, HID_DIM), const),                # w4 (16,4)
            pl.BlockSpec((IN_DIM, 1), const),                      # b4 (16,1)
        ],
        out_specs=(
            pl.BlockSpec((LAT_DIM, TB), lambda i: (0, i)),         # enc (1,TB)
            pl.BlockSpec((TB, IN_DIM), lambda i: (i, 0)),          # dec (TB,16)
        ),
        out_shape=(
            jax.ShapeDtypeStruct((LAT_DIM, B_pad), jnp.float32),
            jax.ShapeDtypeStruct((B_pad, IN_DIM), dec_dtype),
        ),
        compiler_params=pltpu.CompilerParams(
            dimension_semantics=("parallel",),
            vmem_limit_bytes=40 * 1024 * 1024),
        cost_estimate=cost,
    )(x, params["w1"], params["b1"], params["w2"], params["b2"],
      params["w3"], params["b3"], params["w4"], params["b4"])

    # enc is tiny (4 B/row); fixing its layout here costs ~nothing.
    enc = enc_fm[0, :B][:, None]                                   # (B, 1)
    dec = dec_bm[:B]                                               # (B, 16)
    return enc, dec


def init_params(key):
    """PyTorch-Linear-style U(-1/sqrt(fan_in), 1/sqrt(fan_in)) init.

    Kernel-friendly layouts for the feature-major in-kernel compute:
      w1 = W1 (4,16), w2 = W2.T (4,1), w3 = W3 (4,1), w4 = W4 (16,4);
      biases as column vectors, b2 as a scalar (SMEM).
    """
    ks = jax.random.split(key, 8)

    def u(k, shape, fan_in):
        bound = 1.0 / jnp.sqrt(fan_in)
        return jax.random.uniform(k, shape, jnp.float32, -bound, bound)

    return {
        "w1": u(ks[0], (HID_DIM, IN_DIM), IN_DIM),    # (4, 16)
        "b1": u(ks[1], (HID_DIM, 1), IN_DIM),         # (4, 1)
        "w2": u(ks[2], (HID_DIM, 1), HID_DIM),        # (4, 1)
        "b2": u(ks[3], (1,), HID_DIM),                # scalar (SMEM)
        "w3": u(ks[4], (HID_DIM, 1), LAT_DIM),        # (4, 1)
        "b3": u(ks[5], (HID_DIM, 1), LAT_DIM),        # (4, 1)
        "w4": u(ks[6], (IN_DIM, HID_DIM), HID_DIM),   # (16, 4)
        "b4": u(ks[7], (IN_DIM, 1), HID_DIM),         # (16, 1)
    }


def reference_forward(x, p):
    """Pure-JAX reference matching the PyTorch module semantics."""
    h = jnp.tanh(x @ p["w1"].T + p["b1"].T)                      # (B, 4)
    enc = h @ p["w2"] + p["b2"]                                  # (B, 1)
    d = jnp.tanh(enc @ p["w3"].T + p["b3"].T)                    # (B, 4)
    dec = jax.nn.sigmoid(d @ p["w4"].T + p["b4"].T)              # (B, 16)
    return enc, dec


if __name__ == "__main__":
    key = jax.random.PRNGKey(0)
    k_x, k_p, k_x2 = jax.random.split(key, 3)
    params = init_params(k_p)

    # 1) Exact f32 output path (dec_dtype=f32); small batch exercises the
    #    8 -> 128 row padding and a single-step grid.
    B = 8
    x = jax.random.normal(k_x, (B, IN_DIM), jnp.float32)
    enc, dec = jax.block_until_ready(
        autoencoder_forward(x, params, dec_dtype=jnp.float32))
    enc_r, dec_r = reference_forward(x, params)
    assert enc.shape == (B, LAT_DIM) and dec.shape == (B, IN_DIM)
    assert jnp.allclose(enc, enc_r, atol=1e-5, rtol=1e-5)
    assert jnp.allclose(dec, dec_r, atol=1e-5, rtol=1e-5)

    # 2) Default bf16-dec path; ragged batch (multi-step grid + tail pad).
    B2 = 300
    x2 = jax.random.normal(k_x2, (B2, IN_DIM), jnp.float32)
    enc2, dec2 = jax.block_until_ready(autoencoder_forward(x2, params))
    enc2_r, dec2_r = reference_forward(x2, params)
    assert enc2.shape == (B2, LAT_DIM) and dec2.shape == (B2, IN_DIM)
    assert dec2.dtype == jnp.bfloat16
    assert jnp.allclose(enc2, enc2_r, atol=1e-5, rtol=1e-5)
    assert jnp.allclose(dec2.astype(jnp.float32), dec2_r, atol=1e-2, rtol=1e-2)

    print("KERNEL_OK")
</pallas_src>

<mosaic_0001>
module attributes {stable_mosaic.version = 11 : i64} {
  func.func @autoencoder_kernel(%arg0: i32, %arg1: memref<128x16xf32, #tpu.memory_space<vmem>>, %arg2: memref<4x16xf32, #tpu.memory_space<vmem>>, %arg3: memref<4x1xf32, #tpu.memory_space<vmem>>, %arg4: memref<4x1xf32, #tpu.memory_space<vmem>>, %arg5: memref<1xf32, #tpu.memory_space<smem>>, %arg6: memref<4x1xf32, #tpu.memory_space<vmem>>, %arg7: memref<4x1xf32, #tpu.memory_space<vmem>>, %arg8: memref<16x4xf32, #tpu.memory_space<vmem>>, %arg9: memref<16x1xf32, #tpu.memory_space<vmem>>, %arg10: memref<1x128xf32, #tpu.memory_space<vmem>>, %arg11: memref<128x16xf32, #tpu.memory_space<vmem>>) attributes {dimension_semantics = [#tpu.dimension_semantics<parallel>], iteration_bounds = array<i64: 1>, scalar_prefetch = 0 : i64, scratch_operands = 0 : i64, tpu.core_type = #tpu.core_type<tc>, window_params = [{transform_indices = @transform_0, window_bounds = array<i64: 128, 16>}, {pipeline_mode = #tpu.pipeline_mode<synchronous>, transform_indices = @transform_1, window_bounds = array<i64: 4, 16>}, {pipeline_mode = #tpu.pipeline_mode<synchronous>, transform_indices = @transform_2, window_bounds = array<i64: 4, 1>}, {pipeline_mode = #tpu.pipeline_mode<synchronous>, transform_indices = @transform_3, window_bounds = array<i64: 4, 1>}, {transform_indices = @transform_4, window_bounds = array<i64: 1>}, {pipeline_mode = #tpu.pipeline_mode<synchronous>, transform_indices = @transform_5, window_bounds = array<i64: 4, 1>}, {pipeline_mode = #tpu.pipeline_mode<synchronous>, transform_indices = @transform_6, window_bounds = array<i64: 4, 1>}, {pipeline_mode = #tpu.pipeline_mode<synchronous>, transform_indices = @transform_7, window_bounds = array<i64: 16, 4>}, {pipeline_mode = #tpu.pipeline_mode<synchronous>, transform_indices = @transform_8, window_bounds = array<i64: 16, 1>}, {transform_indices = @transform_9, window_bounds = array<i64: 1, 128>}, {transform_indices = @transform_10, window_bounds = array<i64: 128, 16>}]} {
    %c0 = arith.constant 0 : index
    %c0_0 = arith.constant 0 : index
    %0 = vector.load %arg1[%c0, %c0_0] : memref<128x16xf32, #tpu.memory_space<vmem>>, vector<128x16xf32>
    %c0_1 = arith.constant 0 : index
    %c0_2 = arith.constant 0 : index
    %1 = vector.load %arg2[%c0_1, %c0_2] : memref<4x16xf32, #tpu.memory_space<vmem>>, vector<4x16xf32>
    %2 = tpu.transpose %0, [1, 0] : vector<128x16xf32> -> vector<16x128xf32>
    %cst = arith.constant dense<0.000000e+00> : vector<4x128xf32>
    %3 = tpu.matmul %1, %2, %cst {dimension_numbers = #tpu.dot_dimension_numbers<[1], [0], [0], [1], [0, 0, 1, 1], [], []>} : vector<4x16xf32>, vector<16x128xf32>, vector<4x128xf32> -> vector<4x128xf32>
    %c0_3 = arith.constant 0 : index
    %c0_4 = arith.constant 0 : index
    %4 = vector.load %arg3[%c0_3, %c0_4] : memref<4x1xf32, #tpu.memory_space<vmem>>, vector<4x1xf32>
    %5 = vector.broadcast %4 : vector<4x1xf32> to vector<4x128xf32>
    %6 = arith.addf %3, %5 : vector<4x128xf32>
    %7 = math.tanh %6 : vector<4x128xf32>
    %c0_5 = arith.constant 0 : index
    %c0_6 = arith.constant 0 : index
    %8 = vector.load %arg4[%c0_5, %c0_6] : memref<4x1xf32, #tpu.memory_space<vmem>>, vector<4x1xf32>
    %9 = vector.broadcast %8 : vector<4x1xf32> to vector<4x128xf32>
    %10 = arith.mulf %7, %9 : vector<4x128xf32>
    %cst_7 = arith.constant dense<0.000000e+00> : vector<128xf32>
    %11 = vector.multi_reduction <add>, %10, %cst_7 [0] : vector<4x128xf32> to vector<128xf32>
    %12 = vector.shape_cast %11 : vector<128xf32> to vector<1x128xf32>
    %c0_8 = arith.constant 0 : index
    %13 = memref.load %arg5[%c0_8] : memref<1xf32, #tpu.memory_space<smem>>
    %14 = vector.broadcast %13 : f32 to vector<1x128xf32>
    %15 = arith.addf %12, %14 : vector<1x128xf32>
    %c0_9 = arith.constant 0 : index
    %c0_10 = arith.constant 0 : index
    %16 = vector.load %arg10[%c0_9, %c0_10] : memref<1x128xf32, #tpu.memory_space<vmem>>, vector<1x128xf32>
    tpu.vector_store %arg10[%c0_9, %c0_10], %15 {strides = array<i32>} : memref<1x128xf32, #tpu.memory_space<vmem>>, vector<1x128xf32>,
    %c0_11 = arith.constant 0 : index
    %c0_12 = arith.constant 0 : index
    %17 = vector.load %arg6[%c0_11, %c0_12] : memref<4x1xf32, #tpu.memory_space<vmem>>, vector<4x1xf32>
    %18 = vector.broadcast %15 : vector<1x128xf32> to vector<4x128xf32>
    %19 = vector.broadcast %17 : vector<4x1xf32> to vector<4x128xf32>
    %20 = arith.mulf %18, %19 : vector<4x128xf32>
    %c0_13 = arith.constant 0 : index
    %c0_14 = arith.constant 0 : index
    %21 = vector.load %arg7[%c0_13, %c0_14] : memref<4x1xf32, #tpu.memory_space<vmem>>, vector<4x1xf32>
    %22 = vector.broadcast %21 : vector<4x1xf32> to vector<4x128xf32>
    %23 = arith.addf %20, %22 : vector<4x128xf32>
    %24 = math.tanh %23 : vector<4x128xf32>
    %c0_15 = arith.constant 0 : index
    %c0_16 = arith.constant 0 : index
    %25 = vector.load %arg8[%c0_15, %c0_16] : memref<16x4xf32, #tpu.memory_space<vmem>>, vector<16x4xf32>
    %cst_17 = arith.constant dense<0.000000e+00> : vector<16x128xf32>
    %26 = tpu.matmul %25, %24, %cst_17 {dimension_numbers = #tpu.dot_dimension_numbers<[1], [0], [0], [1], [0, 0, 1, 1], [], []>} : vector<16x4xf32>, vector<4x128xf32>, vector<16x128xf32> -> vector<16x128xf32>
    %c0_18 = arith.constant 0 : index
    %c0_19 = arith.constant 0 : index
    %27 = vector.load %arg9[%c0_18, %c0_19] : memref<16x1xf32, #tpu.memory_space<vmem>>, vector<16x1xf32>
    %28 = vector.broadcast %27 : vector<16x1xf32> to vector<16x128xf32>
    %29 = arith.addf %26, %28 : vector<16x128xf32>
    %30 = arith.negf %29 : vector<16x128xf32>
    %31 = math.exp %30 : vector<16x128xf32>
    %cst_20 = arith.constant 1.000000e+00 : f32
    %32 = vector.broadcast %cst_20 : f32 to vector<16x128xf32>
    %33 = arith.addf %32, %31 : vector<16x128xf32>
    %34 = arith.divf %32, %33 : vector<16x128xf32>
    %35 = tpu.transpose %34, [1, 0] : vector<16x128xf32> -> vector<128x16xf32>
    %c0_21 = arith.constant 0 : index
    %c0_22 = arith.constant 0 : index
    %36 = vector.load %arg11[%c0_21, %c0_22] : memref<128x16xf32, #tpu.memory_space<vmem>>, vector<128x16xf32>
    tpu.vector_store %arg11[%c0_21, %c0_22], %35 {strides = array<i32>} : memref<128x16xf32, #tpu.memory_space<vmem>>, vector<128x16xf32>,
    return
  }
  func.func @transform_0(%arg0: i32) -> (i32, i32) {
    %c0_i32 = arith.constant 0 : i32
    %c0_i32_0 = arith.constant 0 : i32
    return %arg0, %c0_i32 : i32, i32
  }
  func.func @transform_1(%arg0: i32) -> (i32, i32) {
    %c0_i32 = arith.constant 0 : i32
    %c0_i32_0 = arith.constant 0 : i32
    %c0_i32_1 = arith.constant 0 : i32
    return %c0_i32, %c0_i32_0 : i32, i32
  }
  func.func @transform_2(%arg0: i32) -> (i32, i32) {
    %c0_i32 = arith.constant 0 : i32
    %c0_i32_0 = arith.constant 0 : i32
    %c0_i32_1 = arith.constant 0 : i32
    return %c0_i32, %c0_i32_0 : i32, i32
  }
  func.func @transform_3(%arg0: i32) -> (i32, i32) {
    %c0_i32 = arith.constant 0 : i32
    %c0_i32_0 = arith.constant 0 : i32
    %c0_i32_1 = arith.constant 0 : i32
    return %c0_i32, %c0_i32_0 : i32, i32
  }
  func.func @transform_4(%arg0: i32) -> i32 {
    %c0_i32 = arith.constant 0 : i32
    %c0_i32_0 = arith.constant 0 : i32
    return %c0_i32 : i32
  }
  func.func @transform_5(%arg0: i32) -> (i32, i32) {
    %c0_i32 = arith.constant 0 : i32
    %c0_i32_0 = arith.constant 0 : i32
    %c0_i32_1 = arith.constant 0 : i32
    return %c0_i32, %c0_i32_0 : i32, i32
  }
  func.func @transform_6(%arg0: i32) -> (i32, i32) {
    %c0_i32 = arith.constant 0 : i32
    %c0_i32_0 = arith.constant 0 : i32
    %c0_i32_1 = arith.constant 0 : i32
    return %c0_i32, %c0_i32_0 : i32, i32
  }
  func.func @transform_7(%arg0: i32) -> (i32, i32) {
    %c0_i32 = arith.constant 0 : i32
    %c0_i32_0 = arith.constant 0 : i32
    %c0_i32_1 = arith.constant 0 : i32
    return %c0_i32, %c0_i32_0 : i32, i32
  }
  func.func @transform_8(%arg0: i32) -> (i32, i32) {
    %c0_i32 = arith.constant 0 : i32
    %c0_i32_0 = arith.constant 0 : i32
    %c0_i32_1 = arith.constant 0 : i32
    return %c0_i32, %c0_i32_0 : i32, i32
  }
  func.func @transform_9(%arg0: i32) -> (i32, i32) {
    %c0_i32 = arith.constant 0 : i32
    %c0_i32_0 = arith.constant 0 : i32
    return %c0_i32, %arg0 : i32, i32
  }
  func.func @transform_10(%arg0: i32) -> (i32, i32) {
    %c0_i32 = arith.constant 0 : i32
    %c0_i32_0 = arith.constant 0 : i32
    return %arg0, %c0_i32 : i32, i32
  }
}

</mosaic_0001>

<llo_original>
// kernel: autoencoder_forward.1
$region0: #{autoencoder_forward.1}
  #allocation0 [shape = 'u32[]', space=smem, size = 0x4, offset = 0x4, fixed_abs, tag = 'smem constant byte address 0x4 - core index']
  #allocation1 [shape = 'u32[144,128]{1,0:T(1,128)}', space=vmem, size = 0x12000, scoped, tag = 'internal scratch']
  #allocation2 [shape = 'f32[1]{0:T(128)S(6)}', space=smem, size = 0x200, scoped, tag = 'scoped memory for autoencoder_forward.1']
  %s0 = inlined_call_operand.vmem [shape: f32[128,16], index: 0, kind: input, shape index: {}]
  %s1 = inlined_call_operand.vmem [shape: f32[4,16], index: 1, kind: input, shape index: {}]
  %s2 = inlined_call_operand.vmem [shape: f32[4,1], index: 2, kind: input, shape index: {}]
  %s3 = inlined_call_operand.vmem [shape: f32[4,1], index: 3, kind: input, shape index: {}]
  %s4 = inlined_call_operand.<no memory space> [shape: f32[1], index: 4, kind: input, shape index: {}]
  %s5 = inlined_call_operand.vmem [shape: f32[4,1], index: 5, kind: input, shape index: {}]
  %s6 = inlined_call_operand.vmem [shape: f32[4,1], index: 6, kind: input, shape index: {}]
  %s7 = inlined_call_operand.vmem [shape: f32[16,4], index: 7, kind: input, shape index: {}]
  %s8 = inlined_call_operand.vmem [shape: f32[16,1], index: 8, kind: input, shape index: {}]
  %s9 = inlined_call_operand.vmem [shape: f32[1,128], index: 9, kind: output, shape index: {0}]
  %s10 = inlined_call_operand.vmem [shape: f32[128,16], index: 10, kind: output, shape index: {1}]
  %11 = xla_tuple %s9, %s10
  %s12 = sld [smem:[#allocation0]]
  $region54: #{autoencoder_forward.1} parent=0
    _
  %s14 = ssub.s32 1, %s12
  %s15 = scalar_select 0, %s14, %s12
  %16 = sst [smem:[#allocation2]] %s4
  // Predicated region
  $region2: #{autoencoder_forward.1} parent=0 // pred_check
    _
  $region3: #{autoencoder_forward.1} parent=0 // pred_check_branch
    %18 = sbr.rel (0) target = $region5
  $region4: #{autoencoder_forward.1} parent=0 // pred_region
    _
  $region5: #{autoencoder_forward.1} parent=0 // pred_fallthru
    _
  // Predicated region
  $region6: #{autoencoder_forward.1} parent=0 // pred_check
    _
  $region7: #{autoencoder_forward.1} parent=0 // pred_check_branch
    %20 = sbr.rel (0) target = $region9
  $region8: #{autoencoder_forward.1} parent=0 // pred_region
    _
  $region9: #{autoencoder_forward.1} parent=0 // pred_fallthru
    _
  // Predicated region
  $region10: #{autoencoder_forward.1} parent=0 // pred_check
    _
  $region11: #{autoencoder_forward.1} parent=0 // pred_check_branch
    %22 = sbr.rel (0) target = $region13
  $region12: #{autoencoder_forward.1} parent=0 // pred_region
    _
  $region13: #{autoencoder_forward.1} parent=0 // pred_fallthru
    _
  // Predicated region
  $region14: #{autoencoder_forward.1} parent=0 // pred_check
    _
  $region15: #{autoencoder_forward.1} parent=0 // pred_check_branch
    %24 = sbr.rel (0) target = $region17
  $region16: #{autoencoder_forward.1} parent=0 // pred_region
    _
  $region17: #{autoencoder_forward.1} parent=0 // pred_fallthru
    _
  // Predicated region
  $region18: #{autoencoder_forward.1} parent=0 // pred_check
    _
  $region19: #{autoencoder_forward.1} parent=0 // pred_check_branch
    %26 = sbr.rel (0) target = $region21
  $region20: #{autoencoder_forward.1} parent=0 // pred_region
    _
  $region21: #{autoencoder_forward.1} parent=0 // pred_fallthru
    _
  // Predicated region
  $region22: #{autoencoder_forward.1} parent=0 // pred_check
    _
  $region23: #{autoencoder_forward.1} parent=0 // pred_check_branch
    %28 = sbr.rel (0) target = $region25
  $region24: #{autoencoder_forward.1} parent=0 // pred_region
    _
  $region25: #{autoencoder_forward.1} parent=0 // pred_fallthru
    _
  // Predicated region
  $region26: #{autoencoder_forward.1} parent=0 // pred_check
    _
  $region27: #{autoencoder_forward.1} parent=0 // pred_check_branch
    %30 = sbr.rel (0) target = $region29
  $region28: #{autoencoder_forward.1} parent=0 // pred_region
    _
  $region29: #{autoencoder_forward.1} parent=0 // pred_fallthru
    _
  // Predicated region
  $region30: #{autoencoder_forward.1} parent=0 // pred_check
    _
  $region31: #{autoencoder_forward.1} parent=0 // pred_check_branch
    %32 = sbr.rel (0) target = $region33
  $region32: #{autoencoder_forward.1} parent=0 // pred_region
    _
  $region33: #{autoencoder_forward.1} parent=0 // pred_fallthru
    _
  // Predicated region
  $region34: #{autoencoder_forward.1} parent=0 // pred_check
    _
  $region35: #{autoencoder_forward.1} parent=0 // pred_check_branch
    %34 = sbr.rel (0) target = $region37
  $region36: #{autoencoder_forward.1} parent=0 // pred_region
    _
  $region37: #{autoencoder_forward.1} parent=0 // pred_fallthru
    _
  %v35 = vld [vmem:[%s0] sm:$0xff]
  %v36 = vld [vmem:[%s0 + $0x8] sm:$0xff]
  %v37 = vld [vmem:[%s0 + $0x10] sm:$0xff]
  %v38 = vld [vmem:[%s0 + $0x18] sm:$0xff]
  %v39 = vld [vmem:[%s0 + $0x20] sm:$0xff]
  %v40 = vld [vmem:[%s0 + $0x28] sm:$0xff]
  %v41 = vld [vmem:[%s0 + $0x30] sm:$0xff]
  %v42 = vld [vmem:[%s0 + $0x38] sm:$0xff]
  %v43 = vld [vmem:[%s0 + $0x40] sm:$0xff]
  %v44 = vld [vmem:[%s0 + $0x48] sm:$0xff]
  %v45 = vld [vmem:[%s0 + $0x50] sm:$0xff]
  %v46 = vld [vmem:[%s0 + $0x58] sm:$0xff]
  %v47 = vld [vmem:[%s0 + $0x60] sm:$0xff]
  %v48 = vld [vmem:[%s0 + $0x68] sm:$0xff]
  %v49 = vld [vmem:[%s0 + $0x70] sm:$0xff]
  %v50 = vld [vmem:[%s0 + $0x78] sm:$0xff]
  %v51 = vld [vmem:[%s1] sm:$0xf]
  %v52 = vld [vmem:[%s2] sm:$0xf]
  %54 = vset.pattern.permute.xlu0 0
  %55 = vperm.xlu0 %54, %v52
  %v56 = vpop.permute.xlu0 %55
  %vm58 = vcmask 130048
  %v60 = vsel %vm58, %v51, 0
  %v63 = vsel %vm58, %v35, 0
  %v66 = vsel %vm58, %v36, 0
  %v69 = vsel %vm58, %v37, 0
  %v72 = vsel %vm58, %v38, 0
  %v75 = vsel %vm58, %v39, 0
  %v78 = vsel %vm58, %v40, 0
  %v81 = vsel %vm58, %v41, 0
  %v84 = vsel %vm58, %v42, 0
  %v87 = vsel %vm58, %v43, 0
  %v90 = vsel %vm58, %v44, 0
  %v93 = vsel %vm58, %v45, 0
  %v96 = vsel %vm58, %v46, 0
  %v99 = vsel %vm58, %v47, 0
  %v102 = vsel %vm58, %v48, 0
  %v105 = vsel %vm58, %v49, 0
  %v108 = vsel %vm58, %v50, 0
  %110 = vmatprep.subr.mxu0 0.0
  %111 = vmatpush1.xpose.msra.mxu0 %v108
  %112 = vmatprep.subr.mxu0 0.0
  %113 = vmatpush1.xpose.msra.mxu0 %v105
  %114 = vmatprep.subr.mxu0 0.0
  %115 = vmatpush1.xpose.msra.mxu0 %v102
  %116 = vmatprep.subr.mxu0 0.0
  %117 = vmatpush1.xpose.msra.mxu0 %v99
  %118 = vmatprep.subr.mxu0 0.0
  %119 = vmatpush1.xpose.msra.mxu0 %v96
  %120 = vmatprep.subr.mxu0 0.0
  %121 = vmatpush1.xpose.msra.mxu0 %v93
  %122 = vmatprep.subr.mxu0 0.0
  %123 = vmatpush1.xpose.msra.mxu0 %v90
  %124 = vmatprep.subr.mxu0 0.0
  %125 = vmatpush1.xpose.msra.mxu0 %v87
  %126 = vmatprep.subr.mxu0 0.0
  %127 = vmatpush1.xpose.msra.mxu0 %v84
  %128 = vmatprep.subr.mxu0 0.0
  %129 = vmatpush1.xpose.msra.mxu0 %v81
  %130 = vmatprep.subr.mxu0 0.0
  %131 = vmatpush1.xpose.msra.mxu0 %v78
  %132 = vmatprep.subr.mxu0 0.0
  %133 = vmatpush1.xpose.msra.mxu0 %v75
  %134 = vmatprep.subr.mxu0 0.0
  %135 = vmatpush1.xpose.msra.mxu0 %v72
  %136 = vmatprep.subr.mxu0 0.0
  %137 = vmatpush1.xpose.msra.mxu0 %v69
  %138 = vmatprep.subr.mxu0 0.0
  %139 = vmatpush1.xpose.msra.mxu0 %v66
  %140 = vmatprep.subr.mxu0 0.0
  %141 = vmatpush1.xpose.msra.mxu0 %v63
  %142 = vmatprep.subr.mxu0 0.0
  %143 = vmatpush2.xpose.msra.mxu0 0.0
  %144 = vmatprep.subr.mxu0 0.0
  %145 = vmatpush2.xpose.msra.mxu0 0.0
  %146 = vmatprep.subr.mxu0 0.0
  %147 = vmatpush2.xpose.msra.mxu0 0.0
  %148 = vmatprep.subr.mxu0 0.0
  %149 = vmatpush2.xpose.msra.mxu0 0.0
  %150 = vmatprep.subr.mxu0 0.0
  %151 = vmatpush2.xpose.msra.mxu0 0.0
  %152 = vmatprep.subr.mxu0 0.0
  %153 = vmatpush2.xpose.msra.mxu0 0.0
  %154 = vmatprep.subr.mxu0 0.0
  %155 = vmatpush2.xpose.msra.mxu0 0.0
  %156 = vmatprep.subr.mxu0 0.0
  %157 = vmatpush2.xpose.msra.mxu0 0.0
  %158 = vmatprep.subr.mxu0 0.0
  %159 = vmatpush2.xpose.msra.mxu0 0.0
  %160 = vmatprep.subr.mxu0 0.0
  %161 = vmatpush2.xpose.msra.mxu0 0.0
  %162 = vmatprep.subr.mxu0 0.0
  %163 = vmatpush2.xpose.msra.mxu0 0.0
  %164 = vmatprep.subr.mxu0 0.0
  %165 = vmatpush2.xpose.msra.mxu0 0.0
  %166 = vmatprep.subr.mxu0 0.0
  %167 = vmatpush2.xpose.msra.mxu0 0.0
  %168 = vmatprep.subr.mxu0 0.0
  %169 = vmatpush2.xpose.msra.mxu0 0.0
  %170 = vmatprep.subr.mxu0 0.0
  %171 = vmatpush2.xpose.msra.mxu0 0.0
  %172 = vmatprep.subr.mxu0 0.0
  %173 = vmatpush2.xpose.msra.mxu0 0.0
  %174 = vmatprep.mubr.f32.mxu0 0.0
  %175 = vmatmul.mubr.f32.gmra.mxu0 %v60
  %v176 = vpop.f32.mrf.mxu0
  %v177 = vadd.f32 %v56, %v176
  %v178 = vpop.f32.mrf.mxu0
  %179 = vdwg.mxu0
  %v180 = vtanh.pop %v177
  %v181 = vld [vmem:[%s3] sm:$0xf]
  %183 = vset.pattern.permute.xlu0 0
  %184 = vperm.xlu0 %183, %v181
  %v185 = vpop.permute.xlu0 %184
  %v187 = vmul.f32 %v180, %v185
  %vm188 = vcmask 1043456
  %v189 = vsel %vm188, %v187, 0.0
  %v190 = vrot.slane %v189, 4
  %v191 = vadd.f32 %v189, %v190
  %v192 = vrot.slane %v191, 2
  %v193 = vadd.f32 %v191, %v192
  %v194 = vrot.slane %v193, 1
  %v195 = vadd.f32 %v193, %v194
  %s196 = sld [smem:[#allocation2]]
  %v197 = vstv %s196
  %v198 = vadd.f32 %v195, %v197
  %199 = vst [vmem:[%s9] sm:$0x1] %v198
  %v200 = vld [vmem:[%s5] sm:$0xf]
  %202 = vset.pattern.permute.xlu0 0
  %203 = vperm.xlu0 %202, %v200
  %v204 = vpop.permute.xlu0 %203
  %v206 = vmul.f32 %v198, %v204
  %v207 = vld [vmem:[%s6] sm:$0xf]
  %209 = vset.pattern.permute.xlu0 0
  %210 = vperm.xlu0 %209, %v207
  %v211 = vpop.permute.xlu0 %210
  %v213 = vadd.f32 %v206, %v211
  %v214 = vtanh.pop %v213
  %v215 = vld [vmem:[%s7] sm:$0xff]
  %v216 = vld [vmem:[%s7 + $0x8] sm:$0xff]
  %v217 = vld [vmem:[%s8] sm:$0xff]
  %v218 = vld [vmem:[%s8 + $0x8] sm:$0xff]
  %220 = vset.pattern.permute.xlu0 0
  %221 = vperm.xlu0 %220, %v217
  %v222 = vpop.permute.xlu0 %221
  %225 = vset.pattern.permute.xlu0 0
  %226 = vperm.xlu0 %225, %v218
  %v227 = vpop.permute.xlu0 %226
  %vm229 = vcmask 31744
  %v231 = vsel %vm229, %v215, 0
  %v234 = vsel %vm229, %v216, 0
  %v237 = vsel %vm188, %v214, 0
  %239 = vmatprep.subr.mxu0 0.0
  %240 = vmatpush1.msra.mxu0 0.0
  %241 = vmatprep.subr.mxu0 0.0
  %242 = vmatpush1.msra.mxu0 0.0
  %243 = vmatprep.subr.mxu0 0.0
  %244 = vmatpush1.msra.mxu0 0.0
  %245 = vmatprep.subr.mxu0 0.0
  %246 = vmatpush1.msra.mxu0 0.0
  %247 = vmatprep.subr.mxu0 0.0
  %248 = vmatpush1.msra.mxu0 0.0
  %249 = vmatprep.subr.mxu0 0.0
  %250 = vmatpush1.msra.mxu0 0.0
  %251 = vmatprep.subr.mxu0 0.0
  %252 = vmatpush1.msra.mxu0 0.0
  %253 = vmatprep.subr.mxu0 0.0
  %254 = vmatpush1.msra.mxu0 0.0
  %255 = vmatprep.subr.mxu0 0.0
  %256 = vmatpush1.msra.mxu0 0.0
  %257 = vmatprep.subr.mxu0 0.0
  %258 = vmatpush1.msra.mxu0 0.0
  %259 = vmatprep.subr.mxu0 0.0
  %260 = vmatpush1.msra.mxu0 0.0
  %261 = vmatprep.subr.mxu0 0.0
  %262 = vmatpush1.msra.mxu0 0.0
  %263 = vmatprep.subr.mxu0 0.0
  %264 = vmatpush1.msra.mxu0 0.0
  %265 = vmatprep.subr.mxu0 0.0
  %266 = vmatpush1.msra.mxu0 0.0
  %267 = vmatprep.subr.mxu0 0.0
  %268 = vmatpush1.msra.mxu0 0.0
  %269 = vmatprep.subr.mxu0 0.0
  %270 = vmatpush1.msra.mxu0 %v237
  %271 = vmatprep.subr.mxu0 0.0
  %272 = vmatpush2.msra.mxu0 0.0
  %273 = vmatprep.subr.mxu0 0.0
  %274 = vmatpush2.msra.mxu0 0.0
  %275 = vmatprep.subr.mxu0 0.0
  %276 = vmatpush2.msra.mxu0 0.0
  %277 = vmatprep.subr.mxu0 0.0
  %278 = vmatpush2.msra.mxu0 0.0
  %279 = vmatprep.subr.mxu0 0.0
  %280 = vmatpush2.msra.mxu0 0.0
  %281 = vmatprep.subr.mxu0 0.0
  %282 = vmatpush2.msra.mxu0 0.0
  %283 = vmatprep.subr.mxu0 0.0
  %284 = vmatpush2.msra.mxu0 0.0
  %285 = vmatprep.subr.mxu0 0.0
  %286 = vmatpush2.msra.mxu0 0.0
  %287 = vmatprep.subr.mxu0 0.0
  %288 = vmatpush2.msra.mxu0 0.0
  %289 = vmatprep.subr.mxu0 0.0
  %290 = vmatpush2.msra.mxu0 0.0
  %291 = vmatprep.subr.mxu0 0.0
  %292 = vmatpush2.msra.mxu0 0.0
  %293 = vmatprep.subr.mxu0 0.0
  %294 = vmatpush2.msra.mxu0 0.0
  %295 = vmatprep.subr.mxu0 0.0
  %296 = vmatpush2.msra.mxu0 0.0
  %297 = vmatprep.subr.mxu0 0.0
  %298 = vmatpush2.msra.mxu0 0.0
  %299 = vmatprep.subr.mxu0 0.0
  %300 = vmatpush2.msra.mxu0 0.0
  %301 = vmatprep.subr.mxu0 0.0
  %302 = vmatpush2.msra.mxu0 0.0
  %303 = vmatprep.mubr.f32.mxu0 0.0
  %304 = vmatmul.mubr.f32.gmra.mxu0 %v231
  %v305 = vpop.f32.mrf.mxu0
  %v306 = vadd.f32 %v222, %v305
  %v307 = vpop.f32.mrf.mxu0
  %308 = vmatprep.mubr.f32.mxu0 0.0
  %309 = vmatmul.mubr.f32.gmra.mxu0 %v234
  %v310 = vpop.f32.mrf.mxu0
  %v311 = vadd.f32 %v227, %v310
  %v312 = vpop.f32.mrf.mxu0
  %313 = vdwg.mxu0
  %v314 = vxor.u32 %v306, 2147483648
  %v315 = vxor.u32 %v311, 2147483648
  %v316 = vmul.f32 %v314, 1.442695
  %v317 = vpow.pop %v316
  %v318 = vmul.f32 %v315, 1.442695
  %v319 = vpow.pop %v318
  %v320 = vadd.f32 %v317, 1.0
  %v321 = vadd.f32 %v319, 1.0
  %v322 = vrcp.pop %v320
  %v323 = vmul.f32 1.0, %v322
  %v324 = vrcp.pop %v321
  %v325 = vmul.f32 1.0, %v324
  %326 = vxpose.xlu0.b32.start [1/16] %v323, 128
  %327 = vxpose.xlu0.b32.cont [2/16] %v325, 128
  %328 = vxpose.xlu0.b32.cont [3/16] 0.0, 128
  %329 = vxpose.xlu0.b32.cont [4/16] 0.0, 128
  %330 = vxpose.xlu0.b32.cont [5/16] 0.0, 128
  %331 = vxpose.xlu0.b32.cont [6/16] 0.0, 128
  %332 = vxpose.xlu0.b32.cont [7/16] 0.0, 128
  %333 = vxpose.xlu0.b32.cont [8/16] 0.0, 128
  %334 = vxpose.xlu0.b32.cont [9/16] 0.0, 128
  %335 = vxpose.xlu0.b32.cont [10/16] 0.0, 128
  %336 = vxpose.xlu0.b32.cont [11/16] 0.0, 128
  %337 = vxpose.xlu0.b32.cont [12/16] 0.0, 128
  %338 = vxpose.xlu0.b32.cont [13/16] 0.0, 128
  %339 = vxpose.xlu0.b32.cont [14/16] 0.0, 128
  %340 = vxpose.xlu0.b32.cont [15/16] 0.0, 128
  %341 = vxpose.xlu0.b32.end [16/16] 0.0, 128
  %v342 = vpop.trf.xlu0
  %v343 = vpop.trf.xlu0
  %v344 = vpop.trf.xlu0
  %v345 = vpop.trf.xlu0
  %v346 = vpop.trf.xlu0
  %v347 = vpop.trf.xlu0
  %v348 = vpop.trf.xlu0
  %v349 = vpop.trf.xlu0
  %v350 = vpop.trf.xlu0
  %v351 = vpop.trf.xlu0
  %v352 = vpop.trf.xlu0
  %v353 = vpop.trf.xlu0
  %v354 = vpop.trf.xlu0
  %v355 = vpop.trf.xlu0
  %v356 = vpop.trf.xlu0
  %v357 = vpop.trf.xlu0
  %358 = vst.msk [vmem:[%s10] sm:$0xff] %vm58, %v342
  %359 = vst.msk [vmem:[%s10 + $0x8] sm:$0xff] %vm58, %v343
  %360 = vst.msk [vmem:[%s10 + $0x10] sm:$0xff] %vm58, %v344
  %361 = vst.msk [vmem:[%s10 + $0x18] sm:$0xff] %vm58, %v345
  %362 = vst.msk [vmem:[%s10 + $0x20] sm:$0xff] %vm58, %v346
  %363 = vst.msk [vmem:[%s10 + $0x28] sm:$0xff] %vm58, %v347
  %364 = vst.msk [vmem:[%s10 + $0x30] sm:$0xff] %vm58, %v348
  %365 = vst.msk [vmem:[%s10 + $0x38] sm:$0xff] %vm58, %v349
  %366 = vst.msk [vmem:[%s10 + $0x40] sm:$0xff] %vm58, %v350
  %367 = vst.msk [vmem:[%s10 + $0x48] sm:$0xff] %vm58, %v351
  %368 = vst.msk [vmem:[%s10 + $0x50] sm:$0xff] %vm58, %v352
  %369 = vst.msk [vmem:[%s10 + $0x58] sm:$0xff] %vm58, %v353
  %370 = vst.msk [vmem:[%s10 + $0x60] sm:$0xff] %vm58, %v354
  %371 = vst.msk [vmem:[%s10 + $0x68] sm:$0xff] %vm58, %v355
  %372 = vst.msk [vmem:[%s10 + $0x70] sm:$0xff] %vm58, %v356
  %373 = vst.msk [vmem:[%s10 + $0x78] sm:$0xff] %vm58, %v357
  // Predicated region
  $region38: #{autoencoder_forward.1} parent=0 // pred_check
    _
  $region39: #{autoencoder_forward.1} parent=0 // pred_check_branch
    %375 = sbr.rel (0) target = $region41
  $region40: #{autoencoder_forward.1} parent=0 // pred_region
    _
  $region41: #{autoencoder_forward.1} parent=0 // pred_fallthru
    _
  // Predicated region
  $region42: #{autoencoder_forward.1} parent=0 // pred_check
    _
  $region43: #{autoencoder_forward.1} parent=0 // pred_check_branch
    %377 = sbr.rel (0) target = $region45
  $region44: #{autoencoder_forward.1} parent=0 // pred_region
    _
  $region45: #{autoencoder_forward.1} parent=0 // pred_fallthru
    _
  // Predicated region
  $region46: #{autoencoder_forward.1} parent=0 // pred_check
    _
  $region47: #{autoencoder_forward.1} parent=0 // pred_check_branch
    %379 = sbr.rel (0) target = $region49
  $region48: #{autoencoder_forward.1} parent=0 // pred_region
    _
  $region49: #{autoencoder_forward.1} parent=0 // pred_fallthru
    _
  // Predicated region
  $region50: #{autoencoder_forward.1} parent=0 // pred_check
    _
  $region51: #{autoencoder_forward.1} parent=0 // pred_check_branch
    %381 = sbr.rel (0) target = $region53
  $region52: #{autoencoder_forward.1} parent=0 // pred_region
    _
  $region53: #{autoencoder_forward.1} parent=0 // pred_fallthru
    _

</llo_original>
